<compile_context>
chip_gen: v7x
topology: tpu7x:2x2x1
jax: 0.10.0
libtpu: 0.0.40
codegen_flags: <defaults>
</compile_context>

<pallas_src>
import jax
import jax.numpy as jnp
from jax.experimental import pallas as pl
from jax.experimental.pallas import tpu as pltpu


LANE = 128  # TPU lane width; pad the tiny (N=2) output to this for dense stores.


# ----------------------------------------------------------------------------
# Pallas kernel: out = sigmoid(x * w_scalar + b1) @ W2 + b2   (all fused)
# ----------------------------------------------------------------------------
def _gssrc_fused_kernel(scale_ref, x_ref, b1_ref, w2_ref, b2_ref, o_ref):
    """scale_ref : SMEM (1,)      f32  -- layer1 scalar diagonal weight
       x_ref     : VMEM (tm, D)   f32  -- input rows
       b1_ref    : VMEM (1, D)    f32  -- layer1 bias (fixed -0.5)
       w2_ref    : VMEM (D, Np)   bf16 -- layer2 weight, lane-padded to Np=128
       b2_ref    : VMEM (1, Np)   f32  -- layer2 bias, lane-padded
       o_ref     : VMEM (tm, Np)  f32
    """
    w = scale_ref[0]                                   # scalar from SMEM
    z = x_ref[...] * w + b1_ref[...]                   # SquareDiagonalLinear
    h = 1.0 / (1.0 + jnp.exp(-z))                      # sigmoid (EUP exp + VPU)
    acc = jnp.dot(h.astype(w2_ref.dtype), w2_ref[...],
                  preferred_element_type=jnp.float32)  # MXU, f32 accumulate
    o_ref[...] = (acc + b2_ref[...]).astype(o_ref.dtype)


def gssrc_forward(params, x):
    """x: (B, D) with D = height_and_width ** 2. Returns (B, 2) logits."""
    x = x.astype(jnp.float32)
    M, D = x.shape
    NP = params["w2_padded"].shape[1]

    # Largest row tile that evenly divides the batch (amortizes per-step overhead);
    # small batches use a single full-extent block.
    tm = M
    for cand in (512, 256, 128):
        if M >= cand and M % cand == 0:
            tm = cand
            break
    grid = (M // tm,)

    out = pl.pallas_call(
        _gssrc_fused_kernel,
        out_shape=jax.ShapeDtypeStruct((M, NP), jnp.float32),
        grid=grid,
        in_specs=[
            pl.BlockSpec(memory_space=pltpu.MemorySpace.SMEM),   # scalar weight
            pl.BlockSpec((tm, D), lambda i: (i, 0)),             # x rows
            pl.BlockSpec((1, D), lambda i: (0, 0)),              # layer1 bias
            pl.BlockSpec((D, NP), lambda i: (0, 0)),             # layer2 weight
            pl.BlockSpec((1, NP), lambda i: (0, 0)),             # layer2 bias
        ],
        out_specs=pl.BlockSpec((tm, NP), lambda i: (i, 0)),
        compiler_params=pltpu.CompilerParams(
            dimension_semantics=("parallel",),
        ),
    )(params["w1"], x, params["b1_2d"], params["w2_padded"], params["b2_padded"])

    return out[:, : params["out_features"]]


# ----------------------------------------------------------------------------
# Parameters (mirror the PyTorch module's __init__)
# ----------------------------------------------------------------------------
def init_params(key, height_and_width, num_classes=2):
    D = height_and_width ** 2
    k1, k2, k3 = jax.random.split(key, 3)
    w1 = jax.random.normal(k1, (1,), jnp.float32)            # tr.randn(1)
    b1 = jnp.full((D,), -0.5, jnp.float32)                   # fixed -1*0.5 bias
    bound = 1.0 / (D ** 0.5)                                  # nn.Linear default init
    w2 = jax.random.uniform(k2, (D, num_classes), jnp.float32, -bound, bound)
    b2 = jax.random.uniform(k3, (num_classes,), jnp.float32, -bound, bound)
    return {"w1": w1, "b1": b1, "w2": w2, "b2": b2}


def prepare_params(raw):
    """One-time constant transform: lane-pad layer2 to 128 cols, cast weight to bf16."""
    D, n_out = raw["w2"].shape
    NP = max(LANE, ((n_out + LANE - 1) // LANE) * LANE)
    w2p = jnp.zeros((D, NP), jnp.bfloat16).at[:, :n_out].set(
        raw["w2"].astype(jnp.bfloat16))
    b2p = jnp.zeros((1, NP), jnp.float32).at[0, :n_out].set(raw["b2"])
    return {
        "w1": raw["w1"],
        "b1_2d": raw["b1"].reshape(1, D),
        "w2_padded": w2p,
        "b2_padded": b2p,
        "out_features": n_out,
    }


def reference_forward(raw, x):
    """Pure-JAX f32 reference (same math as the PyTorch forward)."""
    h = jax.nn.sigmoid(x * raw["w1"][0] + raw["b1"])
    return h @ raw["w2"] + raw["b2"]


if __name__ == "__main__":
    height_and_width = 16            # -> D = 256 features, matching layer1/layer2
    batch = 8
    D = height_and_width ** 2

    key = jax.random.PRNGKey(0)
    kx, kp = jax.random.split(key)
    x = jax.random.normal(kx, (batch, D), jnp.float32)
    raw = init_params(kp, height_and_width, num_classes=2)
    params = prepare_params(raw)

    out = gssrc_forward(params, x)
    out = jax.block_until_ready(out)

    ref = reference_forward(raw, x)
    assert out.shape == (batch, 2)
    assert bool(jnp.all(jnp.isfinite(out)))
    assert bool(jnp.allclose(out, ref, rtol=5e-2, atol=2e-2)), (
        f"max abs err = {float(jnp.max(jnp.abs(out - ref)))}"
    )
    print("KERNEL_OK")
</pallas_src>

<mosaic_0001>
module attributes {stable_mosaic.version = 11 : i64} {
  func.func @_gssrc_fused_kernel(%arg0: i32, %arg1: memref<1xf32, #tpu.memory_space<smem>>, %arg2: memref<8x256xf32, #tpu.memory_space<vmem>>, %arg3: memref<1x256xf32, #tpu.memory_space<vmem>>, %arg4: memref<256x128xbf16, #tpu.memory_space<vmem>>, %arg5: memref<1x128xf32, #tpu.memory_space<vmem>>, %arg6: memref<8x128xf32, #tpu.memory_space<vmem>>) attributes {dimension_semantics = [#tpu.dimension_semantics<parallel>], iteration_bounds = array<i64: 1>, scalar_prefetch = 0 : i64, scratch_operands = 0 : i64, tpu.core_type = #tpu.core_type<tc>, window_params = [{transform_indices = @transform_0, window_bounds = array<i64: 1>}, {transform_indices = @transform_1, window_bounds = array<i64: 8, 256>}, {pipeline_mode = #tpu.pipeline_mode<synchronous>, transform_indices = @transform_2, window_bounds = array<i64: 1, 256>}, {pipeline_mode = #tpu.pipeline_mode<synchronous>, transform_indices = @transform_3, window_bounds = array<i64: 256, 128>}, {pipeline_mode = #tpu.pipeline_mode<synchronous>, transform_indices = @transform_4, window_bounds = array<i64: 1, 128>}, {transform_indices = @transform_5, window_bounds = array<i64: 8, 128>}]} {
    %c0 = arith.constant 0 : index
    %0 = memref.load %arg1[%c0] : memref<1xf32, #tpu.memory_space<smem>>
    %c0_0 = arith.constant 0 : index
    %c0_1 = arith.constant 0 : index
    %1 = vector.load %arg2[%c0_0, %c0_1] : memref<8x256xf32, #tpu.memory_space<vmem>>, vector<8x256xf32>
    %2 = vector.broadcast %0 : f32 to vector<8x256xf32>
    %3 = arith.mulf %1, %2 : vector<8x256xf32>
    %c0_2 = arith.constant 0 : index
    %c0_3 = arith.constant 0 : index
    %4 = vector.load %arg3[%c0_2, %c0_3] : memref<1x256xf32, #tpu.memory_space<vmem>>, vector<1x256xf32>
    %5 = vector.broadcast %4 : vector<1x256xf32> to vector<8x256xf32>
    %6 = arith.addf %3, %5 : vector<8x256xf32>
    %cst = arith.constant 0.000000e+00 : f32
    %7 = vector.broadcast %cst : f32 to vector<8x256xf32>
    %8 = arith.subf %7, %6 : vector<8x256xf32>
    %9 = math.exp %8 : vector<8x256xf32>
    %cst_4 = arith.constant 1.000000e+00 : f32
    %10 = vector.broadcast %cst_4 : f32 to vector<8x256xf32>
    %11 = arith.addf %10, %9 : vector<8x256xf32>
    %cst_5 = arith.constant 1.000000e+00 : f32
    %12 = vector.broadcast %cst_5 : f32 to vector<8x256xf32>
    %13 = arith.divf %12, %11 : vector<8x256xf32>
    %14 = arith.truncf %13 : vector<8x256xf32> to vector<8x256xbf16>
    %c0_6 = arith.constant 0 : index
    %c0_7 = arith.constant 0 : index
    %15 = vector.load %arg4[%c0_6, %c0_7] : memref<256x128xbf16, #tpu.memory_space<vmem>>, vector<256x128xbf16>
    %cst_8 = arith.constant dense<0.000000e+00> : vector<8x128xf32>
    %16 = tpu.matmul %14, %15, %cst_8 {dimension_numbers = #tpu.dot_dimension_numbers<[1], [0], [0], [1], [0, 0, 1, 1], [], []>} : vector<8x256xbf16>, vector<256x128xbf16>, vector<8x128xf32> -> vector<8x128xf32>
    %c0_9 = arith.constant 0 : index
    %c0_10 = arith.constant 0 : index
    %17 = vector.load %arg5[%c0_9, %c0_10] : memref<1x128xf32, #tpu.memory_space<vmem>>, vector<1x128xf32>
    %18 = vector.broadcast %17 : vector<1x128xf32> to vector<8x128xf32>
    %19 = arith.addf %16, %18 : vector<8x128xf32>
    %c0_11 = arith.constant 0 : index
    %c0_12 = arith.constant 0 : index
    %20 = vector.load %arg6[%c0_11, %c0_12] : memref<8x128xf32, #tpu.memory_space<vmem>>, vector<8x128xf32>
    tpu.vector_store %arg6[%c0_11, %c0_12], %19 {strides = array<i32>} : memref<8x128xf32, #tpu.memory_space<vmem>>, vector<8x128xf32>,
    return
  }
  func.func @transform_0(%arg0: i32) -> i32 {
    %c0_i32 = arith.constant 0 : i32
    %c0_i32_0 = arith.constant 0 : i32
    return %c0_i32 : i32
  }
  func.func @transform_1(%arg0: i32) -> (i32, i32) {
    %c0_i32 = arith.constant 0 : i32
    %c0_i32_0 = arith.constant 0 : i32
    return %arg0, %c0_i32 : i32, i32
  }
  func.func @transform_2(%arg0: i32) -> (i32, i32) {
    %c0_i32 = arith.constant 0 : i32
    %c0_i32_0 = arith.constant 0 : i32
    %c0_i32_1 = arith.constant 0 : i32
    return %c0_i32, %c0_i32_0 : i32, i32
  }
  func.func @transform_3(%arg0: i32) -> (i32, i32) {
    %c0_i32 = arith.constant 0 : i32
    %c0_i32_0 = arith.constant 0 : i32
    %c0_i32_1 = arith.constant 0 : i32
    return %c0_i32, %c0_i32_0 : i32, i32
  }
  func.func @transform_4(%arg0: i32) -> (i32, i32) {
    %c0_i32 = arith.constant 0 : i32
    %c0_i32_0 = arith.constant 0 : i32
    %c0_i32_1 = arith.constant 0 : i32
    return %c0_i32, %c0_i32_0 : i32, i32
  }
  func.func @transform_5(%arg0: i32) -> (i32, i32) {
    %c0_i32 = arith.constant 0 : i32
    %c0_i32_0 = arith.constant 0 : i32
    return %arg0, %c0_i32 : i32, i32
  }
}

</mosaic_0001>

<llo_original>
// kernel: tpu_custom_call.1
$region0: #{tpu_custom_call.1}
  #allocation0 [shape = 'u32[]', space=smem, size = 0x4, offset = 0x4, fixed_abs, tag = 'smem constant byte address 0x4 - core index']
  #allocation1 [shape = 'u32[144,128]{1,0:T(1,128)}', space=vmem, size = 0x12000, scoped, tag = 'internal scratch']
  #allocation2 [shape = 'f32[1]{0:T(128)S(6)}', space=smem, size = 0x200, scoped, tag = 'scoped memory for tpu_custom_call.1']
  %s0 = inlined_call_operand.<no memory space> [shape: f32[1], index: 0, kind: input, shape index: {}]
  %s1 = inlined_call_operand.hbm [shape: f32[8,256], index: 1, kind: input, shape index: {}]
  %s2 = inlined_call_operand.vmem [shape: f32[1,256], index: 2, kind: input, shape index: {}]
  %s3 = inlined_call_operand.hbm [shape: bf16[256,128], index: 3, kind: input, shape index: {}]
  %s4 = inlined_call_operand.vmem [shape: f32[1,128], index: 4, kind: input, shape index: {}]
  %s5 = inlined_call_operand.hbm [shape: f32[8,128], index: 5, kind: output, shape index: {}]
  %s6 = sld [smem:[#allocation0]]
  $region38: #{tpu_custom_call.1} parent=0
    _
  %s8 = ssub.s32 1, %s6
  %s9 = scalar_select 0, %s8, %s6
  %10 = sst [smem:[#allocation2]] %s0
  $region1: #{tpu_custom_call.1} parent=0
    #allocation3 [shape = 'u8[8192]{0}', space=vmem, size = 0x2000, scoped, tag = 'input window, operand 1, single buffered']
    #allocation4 [shape = 's32[1]{0}', space=sflag, size = 0x4, scoped, tag = 'scoped memory for tpu_custom_call.1']
    #allocation5 [shape = 's32[1]{0}', space=sflag, size = 0x4, scoped, tag = 'scoped memory for tpu_custom_call.1']
    #allocation6 [shape = 'u8[65536]{0}', space=vmem, size = 0x10000, scoped, tag = 'input window, operand 3, single buffered']
    #allocation7 [shape = 's32[1]{0}', space=sflag, size = 0x4, scoped, tag = 'scoped memory for tpu_custom_call.1']
    #allocation8 [shape = 'u8[4096]{0}', space=vmem, size = 0x1000, scoped, tag = 'output window, operand 0, single buffered']
    %11 = vsyncpa [#allocation4], 0
    %12 = vsyncpa [#allocation7], 0
    %13 = vsyncpa [#allocation5], 0
    // Predicated region
    $region2: #{tpu_custom_call.1} parent=1 // pred_check
      _
    $region3: #{tpu_custom_call.1} parent=1 // pred_check_branch
      %15 = sbr.rel (0) target = $region5
    $region4: #{tpu_custom_call.1} parent=1 // pred_region
      _
    $region5: #{tpu_custom_call.1} parent=1 // pred_fallthru
      _
    // Predicated region
    $region6: #{tpu_custom_call.1} parent=1 // pred_check
      _
    $region7: #{tpu_custom_call.1} parent=1 // pred_check_branch
      %17 = sbr.rel (0) target = $region9
    $region8: #{tpu_custom_call.1} parent=1 // pred_region
      %s19 = ssub.s32 256, 256
      %20 = vsyncadd [#allocation4], %s19
      %s22 = sshll.u32 [#allocation3], 4
      %s23 = int_to_ptr.vmem [resolvable:$true] %s22
      %25 = dma.hbm_to_vmem [thread:$0]  %s1, 256, %s23, [#allocation4]
    $region9: #{tpu_custom_call.1} parent=1 // pred_fallthru
      _
    // Predicated region
    $region10: #{tpu_custom_call.1} parent=1 // pred_check
      _
    $region11: #{tpu_custom_call.1} parent=1 // pred_check_branch
      %27 = sbr.rel (0) target = $region13
    $region12: #{tpu_custom_call.1} parent=1 // pred_region
      _
    $region13: #{tpu_custom_call.1} parent=1 // pred_fallthru
      _
    // Predicated region
    $region14: #{tpu_custom_call.1} parent=1 // pred_check
      _
    $region15: #{tpu_custom_call.1} parent=1 // pred_check_branch
      %29 = sbr.rel (0) target = $region17
    $region16: #{tpu_custom_call.1} parent=1 // pred_region
      %s31 = ssub.s32 2048, 2048
      %32 = vsyncadd [#allocation7], %s31
      %s33 = sshll.u32 [#allocation6], 4
      %s34 = int_to_ptr.vmem [resolvable:$true] %s33
      %39 = dma.hbm_to_vmem [thread:$0]  %s3, 2048, %s34, [#allocation7], 64, 64, 4
    $region17: #{tpu_custom_call.1} parent=1 // pred_fallthru
      _
    // Predicated region
    $region18: #{tpu_custom_call.1} parent=1 // pred_check
      _
    $region19: #{tpu_custom_call.1} parent=1 // pred_check_branch
      %41 = sbr.rel (0) target = $region21
    $region20: #{tpu_custom_call.1} parent=1 // pred_region
      _
    $region21: #{tpu_custom_call.1} parent=1 // pred_fallthru
      _
    // Predicated region
    $region22: #{tpu_custom_call.1} parent=1 // pred_check
      _
    $region23: #{tpu_custom_call.1} parent=1 // pred_check_branch
      %43 = sbr.rel (0) target = $region25
    $region24: #{tpu_custom_call.1} parent=1 // pred_region
      %44 = dma.done [#allocation4], 256
    $region25: #{tpu_custom_call.1} parent=1 // pred_fallthru
      _
    // Predicated region
    $region26: #{tpu_custom_call.1} parent=1 // pred_check
      _
    $region27: #{tpu_custom_call.1} parent=1 // pred_check_branch
      %46 = sbr.rel (0) target = $region29
    $region28: #{tpu_custom_call.1} parent=1 // pred_region
      %47 = dma.done [#allocation7], 2048
    $region29: #{tpu_custom_call.1} parent=1 // pred_fallthru
      _
    %s49 = sld [smem:[#allocation2]]
    %v50 = vld [vmem:[#allocation3] sm:$0xff]
    %v51 = vld [vmem:[#allocation3 + $0x8] sm:$0xff]
    %v52 = vstv %s49
    %v53 = vmul.f32 %v50, %v52
    %v54 = vmul.f32 %v51, %v52
    %v55 = vld [vmem:[%s2] sm:$0x3]
    %v57 = vlaneseq
    %v58 = vshrl.u32 %v57, 7
    %v59 = vsub.s32 0, %v58
    %v60 = vrot.slane %v55, %v59
    %v61 = vlaneseq
    %v62 = vshrl.u32 %v61, 7
    %v63 = vsub.s32 1, %v62
    %v64 = vrot.slane %v55, %v63
    %v67 = vadd.f32 %v53, %v60
    %v68 = vadd.f32 %v54, %v64
    %v69 = vsub.f32 0.0, %v67
    %v70 = vsub.f32 0.0, %v68
    %v71 = vmul.f32 %v69, 1.442695
    %v72 = vpow.pop %v71
    %v73 = vmul.f32 %v70, 1.442695
    %v74 = vpow.pop %v73
    %v75 = vadd.f32 %v72, 1.0
    %v76 = vadd.f32 %v74, 1.0
    %v77 = vrcp.pop %v75
    %v78 = vmul.f32 1.0, %v77
    %v79 = vrcp.pop %v76
    %v80 = vmul.f32 1.0, %v79
    %v81 = vpack.c.bf16 %v78, %v78
    %v82 = vpack.c.bf16 %v80, %v80
    %v83 = vld [vmem:[#allocation6] sm:$0xf]
    %v84 = vld [vmem:[#allocation6 + $0x4] sm:$0xf]
    %v85 = vld [vmem:[#allocation6 + $0x8] sm:$0xf]
    %v86 = vld [vmem:[#allocation6 + $0xc] sm:$0xf]
    %v87 = vld [vmem:[#allocation6 + $0x10] sm:$0xf]
    %v88 = vld [vmem:[#allocation6 + $0x14] sm:$0xf]
    %v89 = vld [vmem:[#allocation6 + $0x18] sm:$0xf]
    %v90 = vld [vmem:[#allocation6 + $0x1c] sm:$0xf]
    %v91 = vld [vmem:[#allocation6 + $0x20] sm:$0xf]
    %v92 = vld [vmem:[#allocation6 + $0x24] sm:$0xf]
    %v93 = vld [vmem:[#allocation6 + $0x28] sm:$0xf]
    %v94 = vld [vmem:[#allocation6 + $0x2c] sm:$0xf]
    %v95 = vld [vmem:[#allocation6 + $0x30] sm:$0xf]
    %v96 = vld [vmem:[#allocation6 + $0x34] sm:$0xf]
    %v97 = vld [vmem:[#allocation6 + $0x38] sm:$0xf]
    %v98 = vld [vmem:[#allocation6 + $0x3c] sm:$0xf]
    %v99 = vld [vmem:[#allocation6 + $0x40] sm:$0xf]
    %v100 = vld [vmem:[#allocation6 + $0x44] sm:$0xf]
    %v101 = vld [vmem:[#allocation6 + $0x48] sm:$0xf]
    %v102 = vld [vmem:[#allocation6 + $0x4c] sm:$0xf]
    %v103 = vld [vmem:[#allocation6 + $0x50] sm:$0xf]
    %v104 = vld [vmem:[#allocation6 + $0x54] sm:$0xf]
    %v105 = vld [vmem:[#allocation6 + $0x58] sm:$0xf]
    %v106 = vld [vmem:[#allocation6 + $0x5c] sm:$0xf]
    %v107 = vld [vmem:[#allocation6 + $0x60] sm:$0xf]
    %v108 = vld [vmem:[#allocation6 + $0x64] sm:$0xf]
    %v109 = vld [vmem:[#allocation6 + $0x68] sm:$0xf]
    %v110 = vld [vmem:[#allocation6 + $0x6c] sm:$0xf]
    %v111 = vld [vmem:[#allocation6 + $0x70] sm:$0xf]
    %v112 = vld [vmem:[#allocation6 + $0x74] sm:$0xf]
    %v113 = vld [vmem:[#allocation6 + $0x78] sm:$0xf]
    %v114 = vld [vmem:[#allocation6 + $0x7c] sm:$0xf]
    %v115 = vld [vmem:[%s4] sm:$0x1]
    %v117 = vlaneseq
    %v118 = vshrl.u32 %v117, 7
    %v119 = vsub.s32 0, %v118
    %v120 = vrot.slane %v115, %v119
    %v154 = vunpack.c.l.b16 %v83
    %v155 = vunpack.c.l.b16 %v84
    %v156 = vunpack.c.l.b16 %v85
    %v157 = vunpack.c.l.b16 %v86
    %v158 = vunpack.c.l.b16 %v87
    %v159 = vunpack.c.l.b16 %v88
    %v160 = vunpack.c.l.b16 %v89
    %v161 = vunpack.c.l.b16 %v90
    %v162 = vunpack.c.l.b16 %v91
    %v163 = vunpack.c.l.b16 %v92
    %v164 = vunpack.c.l.b16 %v93
    %v165 = vunpack.c.l.b16 %v94
    %v166 = vunpack.c.l.b16 %v95
    %v167 = vunpack.c.l.b16 %v96
    %v168 = vunpack.c.l.b16 %v97
    %v169 = vunpack.c.l.b16 %v98
    %v170 = vunpack.c.l.b16 %v99
    %v171 = vunpack.c.l.b16 %v100
    %v172 = vunpack.c.l.b16 %v101
    %v173 = vunpack.c.l.b16 %v102
    %v174 = vunpack.c.l.b16 %v103
    %v175 = vunpack.c.l.b16 %v104
    %v176 = vunpack.c.l.b16 %v105
    %v177 = vunpack.c.l.b16 %v106
    %v178 = vunpack.c.l.b16 %v107
    %v179 = vunpack.c.l.b16 %v108
    %v180 = vunpack.c.l.b16 %v109
    %v181 = vunpack.c.l.b16 %v110
    %v182 = vunpack.c.l.b16 %v111
    %v183 = vunpack.c.l.b16 %v112
    %v184 = vunpack.c.l.b16 %v113
    %v185 = vunpack.c.l.b16 %v114
    %v186 = vpack.c.b16 %v155, %v154
    %v187 = vpack.c.b16 %v157, %v156
    %v188 = vpack.c.b16 %v159, %v158
    %v189 = vpack.c.b16 %v161, %v160
    %v190 = vpack.c.b16 %v163, %v162
    %v191 = vpack.c.b16 %v165, %v164
    %v192 = vpack.c.b16 %v167, %v166
    %v193 = vpack.c.b16 %v169, %v168
    %v194 = vpack.c.b16 %v171, %v170
    %v195 = vpack.c.b16 %v173, %v172
    %v196 = vpack.c.b16 %v175, %v174
    %v197 = vpack.c.b16 %v177, %v176
    %v198 = vpack.c.b16 %v179, %v178
    %v199 = vpack.c.b16 %v181, %v180
    %v200 = vpack.c.b16 %v183, %v182
    %v201 = vpack.c.b16 %v185, %v184
    %218 = vmatprep.subr.bf16.mxu0 0
    %219 = vmatpush1.bf16.msra.mxu0 %v186
    %220 = vmatprep.subr.bf16.mxu0 0
    %221 = vmatpush1.bf16.msra.mxu0 %v187
    %222 = vmatprep.subr.bf16.mxu0 0
    %223 = vmatpush1.bf16.msra.mxu0 %v188
    %224 = vmatprep.subr.bf16.mxu0 0
    %225 = vmatpush1.bf16.msra.mxu0 %v189
    %226 = vmatprep.subr.bf16.mxu0 0
    %227 = vmatpush1.bf16.msra.mxu0 %v190
    %228 = vmatprep.subr.bf16.mxu0 0
    %229 = vmatpush1.bf16.msra.mxu0 %v191
    %230 = vmatprep.subr.bf16.mxu0 0
    %231 = vmatpush1.bf16.msra.mxu0 %v192
    %232 = vmatprep.subr.bf16.mxu0 0
    %233 = vmatpush1.bf16.msra.mxu0 %v193
    %234 = vmatprep.subr.bf16.mxu0 0
    %235 = vmatpush1.bf16.msra.mxu0 %v194
    %236 = vmatprep.subr.bf16.mxu0 0
    %237 = vmatpush1.bf16.msra.mxu0 %v195
    %238 = vmatprep.subr.bf16.mxu0 0
    %239 = vmatpush1.bf16.msra.mxu0 %v196
    %240 = vmatprep.subr.bf16.mxu0 0
    %241 = vmatpush1.bf16.msra.mxu0 %v197
    %242 = vmatprep.subr.bf16.mxu0 0
    %243 = vmatpush1.bf16.msra.mxu0 %v198
    %244 = vmatprep.subr.bf16.mxu0 0
    %245 = vmatpush1.bf16.msra.mxu0 %v199
    %246 = vmatprep.subr.bf16.mxu0 0
    %247 = vmatpush1.bf16.msra.mxu0 %v200
    %248 = vmatprep.subr.bf16.mxu0 0
    %249 = vmatpush1.bf16.msra.mxu0 %v201
    %250 = vmatprep.mubr.bf16.mxu0 %v82
    %251 = vmatmul.mubr.bf16.gmra.mrb[0].mxu0 %v81
    %v252 = vpop.f32.mrb[0].mxu0
    %v253 = vadd.f32 %v120, %v252
    %v254 = vpop.f32.mrb[0].mxu0
    %v255 = vpop.f32.mrb[0].mxu0
    %v256 = vpop.f32.mrb[0].mxu0
    %257 = vdwg.mxu0
    %258 = vst [vmem:[#allocation8] sm:$0xff] %v253
    // Predicated region
    $region30: #{tpu_custom_call.1} parent=1 // pred_check
      _
    $region31: #{tpu_custom_call.1} parent=1 // pred_check_branch
      %260 = sbr.rel (0) target = $region33
    $region32: #{tpu_custom_call.1} parent=1 // pred_region
      %s262 = ssub.s32 128, 128
      %263 = vsyncadd [#allocation5], %s262
      %s265 = sshll.u32 [#allocation8], 4
      %s266 = int_to_ptr.vmem [resolvable:$true] %s265
      %268 = dma.vmem_to_hbm [thread:$0]  %s266, 128, %s5, [#allocation5]
    $region33: #{tpu_custom_call.1} parent=1 // pred_fallthru
      _
    // Predicated region
    $region34: #{tpu_custom_call.1} parent=1 // pred_check
      _
    $region35: #{tpu_custom_call.1} parent=1 // pred_check_branch
      %270 = sbr.rel (0) target = $region37
    $region36: #{tpu_custom_call.1} parent=1 // pred_region
      %271 = dma.done [#allocation5], 128
    $region37: #{tpu_custom_call.1} parent=1 // pred_fallthru
      _
    %272 = vsyncpa [#allocation4], 1
    %273 = vsyncpa [#allocation7], 1
    %274 = vsyncpa [#allocation5], 1

</llo_original>
